<compile_context>
chip_gen: v6e
topology: v6e:2x2x1
jax: 0.10.0
libtpu: 0.0.40
codegen_flags: <defaults>
</compile_context>

<pallas_src>
import functools

import jax
import jax.numpy as jnp
import numpy as np
from jax.experimental import pallas as pl
from jax.experimental.pallas import tpu as pltpu


# --------------------------------------------------------------------------- #
# Small helpers
# --------------------------------------------------------------------------- #
def _round_up(v, m):
    return (v + m - 1) // m * m


def _itemsize(dt):
    return np.dtype(dt).itemsize


def _padded_tile_bytes(shape, itemsize):
    """VMEM bytes of one buffer of `shape`, padded to the (8, 128) vreg tiling."""
    if len(shape) == 0:
        return itemsize
    if len(shape) == 1:
        return _round_up(shape[0], 128) * itemsize
    lead = 1
    for d in shape[:-2]:
        lead *= int(d)
    return lead * _round_up(int(shape[-2]), 8) * _round_up(int(shape[-1]), 128) * itemsize


def _vmem_capacity_bytes():
    try:
        return int(pltpu.get_tpu_info().vmem_capacity_bytes)
    except Exception:
        return 64 * 2 ** 20  # conservative default: v7x physical VMEM


# --------------------------------------------------------------------------- #
# Kernel bodies
# --------------------------------------------------------------------------- #
def _patch_embed_kernel_fused(x_ref, w_ref, b_ref, o_ref, *, rows, ph, n_w, pwc,
                              e_pad, compute_dtype):
    """One grid step = `rows` patch-rows (= rows*n_w patches), ONE big-K matmul.

    x_ref: (rows, ph, n_w, pw*C)  raw pixels (im2col finishes here, in VMEM)
    w_ref: (ph*pw*C, E_pad)       flattened projection weight (grid-resident)
    b_ref: (1, E_pad)             bias, f32 (grid-resident)
    o_ref: (rows, n_w, E_pad)     embedded patches for this slab
    """
    m = rows * n_w
    k = ph * pwc
    x = x_ref[...].astype(compute_dtype)  # on-chip cast (no-op if already cast)
    # Tile-local im2col finish: bring the ph intra-patch rows of every patch
    # together once per tile, then run a single matmul with K = ph*pw*C so the
    # MXU systolic depth is fully used (vs. K = pw*C per matmul before).
    xk = jnp.concatenate([x[:, i] for i in range(ph)], axis=-1)   # (rows, n_w, K)
    acc = jnp.dot(xk.reshape(m, k), w_ref[...],
                  preferred_element_type=jnp.float32)             # (m, E_pad) f32
    acc = acc + b_ref[...]
    o_ref[...] = acc.reshape(rows, n_w, e_pad).astype(o_ref.dtype)


def _patch_embed_kernel_looped(x_ref, w_ref, b_ref, o_ref, *, rows, ph, n_w, pwc,
                               e_pad, compute_dtype):
    """Fallback body (known-good Mosaic ops only): accumulate ph small-K matmuls."""
    m = rows * n_w
    x = x_ref[...].astype(compute_dtype)
    w = w_ref[...]
    acc = jnp.dot(x[:, 0].reshape(m, pwc), w[:pwc, :],
                  preferred_element_type=jnp.float32)
    for i in range(1, ph):  # static unroll; ph is small (4..16)
        acc = acc + jnp.dot(x[:, i].reshape(m, pwc), w[i * pwc:(i + 1) * pwc, :],
                            preferred_element_type=jnp.float32)
    acc = acc + b_ref[...]
    o_ref[...] = acc.reshape(rows, n_w, e_pad).astype(o_ref.dtype)


# --------------------------------------------------------------------------- #
# Parameter preparation (hoistable out of the per-call hot path)
# --------------------------------------------------------------------------- #
def prepare_patch_embed_params(weight, bias, compute_dtype=jnp.bfloat16):
    """One-time parameter transform.

    weight: (E, C, ph, pw) Conv2d weight; bias: (E,).
    Returns (w_flat, b_row, e_pad):
      w_flat[i*(pw*C) + j*C + c, e] = weight[e, c, i, j], shape (ph*pw*C, E_pad)
      b_row: (1, E_pad) float32
    E is zero-padded to a multiple of 128 so kernel stores are lane-dense.
    """
    E, C, ph, pw = weight.shape
    e_pad = _round_up(E, 128)
    w_flat = jnp.transpose(weight, (2, 3, 1, 0)).reshape(ph * pw * C, E)
    b_row = bias.astype(jnp.float32).reshape(1, E)
    if e_pad != E:
        w_flat = jnp.pad(w_flat, ((0, 0), (0, e_pad - E)))
        b_row = jnp.pad(b_row, ((0, 0), (0, e_pad - E)))
    return w_flat.astype(compute_dtype), b_row, e_pad


# --------------------------------------------------------------------------- #
# Tile-size selection: (8,128)-padding aware, includes matmul temporaries
# --------------------------------------------------------------------------- #
def _choose_rows(total_rows, n_w, ph, pwc, e_pad, k, in_item, cdt_item, out_item,
                 max_patches, vmem_budget):
    """Largest divisor of total_rows whose per-step working set (padded tiles,
    double buffering, rearranged LHS + f32 accumulator temporaries) fits."""
    resident = (2 * _padded_tile_bytes((k, e_pad), cdt_item)
                + 2 * _padded_tile_bytes((1, e_pad), 4))
    best, best_need = None, None
    for rows in range(1, total_rows + 1):
        if total_rows % rows:
            continue
        if total_rows >= 2 and total_rows // rows < 2:
            continue  # keep >=2 grid steps so both v7x TensorCores get work
        m = rows * n_w
        x_blk = _padded_tile_bytes((rows, ph, n_w, pwc), in_item)
        o_blk = _padded_tile_bytes((rows, n_w, e_pad), out_item)
        tmp = (2 * _padded_tile_bytes((m, k), cdt_item)      # rearranged LHS
               + 2 * _padded_tile_bytes((m, e_pad), 4))      # f32 accumulator
        need = 2 * (x_blk + o_blk) + resident + tmp
        if (rows == 1 or m <= max_patches) and need <= vmem_budget:
            best, best_need = rows, need
    if best is None:
        raise ValueError(
            f"patch_embed: even a single patch-row (ph={ph}, n_w={n_w}, "
            f"pw*C={pwc}, E_pad={e_pad}) does not fit the VMEM budget "
            f"({vmem_budget} bytes); reduce patch/channel sizes or the budget.")
    return best, best_need


# --------------------------------------------------------------------------- #
# Public wrapper
# --------------------------------------------------------------------------- #
def patch_embed(x, weight, bias, patch_size, *, input_format="NCHW",
                compute_dtype=jnp.bfloat16, out_dtype=None, params=None,
                max_patches_per_step=1024):
    """ViT patch embedding: Conv2d(k=stride=patch) + flatten(2) + transpose(1, 2).

    x: (B, C, H, W) NCHW (PyTorch layout), or (B, H, W, C) if input_format="NHWC"
       (the NHWC path does no HBM layout change and casts on-chip).
    weight: (E, C, ph, pw); bias: (E,).  Returns (B, num_patches, E).
    """
    ph, pw = patch_size
    if input_format == "NCHW":
        B, C, H, W = x.shape
        # One cheap layout change, fused with the compute-dtype cast by XLA.
        x_nhwc = jnp.transpose(x, (0, 2, 3, 1)).astype(compute_dtype)
    elif input_format == "NHWC":
        B, H, W, C = x.shape
        x_nhwc = x  # native dtype; kernel casts on-chip -> half the input HBM traffic
    else:
        raise ValueError(f"unknown input_format: {input_format!r}")
    if H % ph or W % pw:
        raise ValueError(f"image ({H},{W}) not divisible by patch ({ph},{pw})")

    E = weight.shape[0]
    n_h, n_w = H // ph, W // pw
    pwc = pw * C
    k = ph * pwc
    out_dtype = x.dtype if out_dtype is None else out_dtype

    if params is None:
        params = prepare_patch_embed_params(weight, bias, compute_dtype)
    w_flat, b_row, e_pad = params

    # Free 4-D view with batch collapsed into the patch-row axis:
    #   x4[b*n_h + rh, i, rw, j*C + c] = pixel of patch (rh, rw) at (i, j), chan c.
    total_rows = B * n_h
    x4 = x_nhwc.reshape(total_rows, ph, n_w, pwc)

    # Per-generation VMEM sizing (v5e/v6e: 128 MiB physical; v7x: 64 MiB).
    cap = _vmem_capacity_bytes()
    vmem_budget = min(int(0.45 * cap), 96 * 2 ** 20)
    rows, need = _choose_rows(total_rows, n_w, ph, pwc, e_pad, k,
                              _itemsize(x4.dtype), _itemsize(compute_dtype),
                              _itemsize(out_dtype), max_patches_per_step,
                              vmem_budget)
    vmem_limit = int(min(min(112 * 2 ** 20, int(0.9 * cap)),
                         max(32 * 2 ** 20, 2 * need)))

    grid = (total_rows // rows,)
    in_specs = [
        # `rows` patch-rows of raw pixels per step; last two dims are full, so
        # the BlockSpec (8,128) constraint is satisfied for any (n_w, pw*C).
        pl.BlockSpec((rows, ph, n_w, pwc), lambda r: (r, 0, 0, 0)),
        # Weight and bias stay resident across the grid (constant index maps).
        # (A single-buffer pipeline_mode would save one weight copy on v7x; the
        #  weight is small so we keep the default for maximum compatibility.)
        pl.BlockSpec((k, e_pad), lambda r: (0, 0)),
        pl.BlockSpec((1, e_pad), lambda r: (0, 0)),
    ]
    out_spec = pl.BlockSpec((rows, n_w, e_pad), lambda r: (r, 0, 0))
    out_shape = jax.ShapeDtypeStruct((total_rows, n_w, e_pad), out_dtype)
    cparams = pltpu.CompilerParams(dimension_semantics=("parallel",),
                                   vmem_limit_bytes=vmem_limit)
    common = dict(rows=rows, ph=ph, n_w=n_w, pwc=pwc, e_pad=e_pad,
                  compute_dtype=compute_dtype)

    def run(body):
        return pl.pallas_call(
            functools.partial(body, **common),
            out_shape=out_shape,
            grid=grid,
            in_specs=in_specs,
            out_specs=out_spec,
            compiler_params=cparams,
        )(x4, w_flat, b_row)

    try:
        out = run(_patch_embed_kernel_fused)
    except Exception:
        # Robustness guard: if Mosaic cannot lower the tile-local concat/reshape
        # for this (ph, pw, C), fall back to the per-intra-patch-row accumulation
        # body (uses only known-good ops).  Only effective when called eagerly.
        out = run(_patch_embed_kernel_looped)

    out = out.reshape(B, n_h * n_w, e_pad)
    if e_pad != E:
        out = out[:, :, :E]  # drop lane padding (only when embed_dim % 128 != 0)
    return out


# --------------------------------------------------------------------------- #
# Pure-JAX reference mirroring the PyTorch forward
# --------------------------------------------------------------------------- #
def patch_embed_reference(x, weight, bias, patch_size):
    out = jax.lax.conv_general_dilated(
        x, weight,
        window_strides=patch_size,
        padding="VALID",
        dimension_numbers=("NCHW", "OIHW", "NCHW"),
    )  # (B, E, nH, nW)
    out = out + bias.reshape(1, -1, 1, 1)
    B, E = out.shape[0], out.shape[1]
    return out.reshape(B, E, -1).transpose(0, 2, 1)  # (B, num_patches, E)


if __name__ == "__main__":
    # Small shapes consistent with the module: img_size=16, patch_size=4,
    # in_chans=4, embed_dim=32  ->  num_patches = 16, K = ph*pw*C = 64.
    B, C, H, W = 2, 4, 16, 16
    patch = (4, 4)
    E = 32

    key = jax.random.PRNGKey(0)
    kx, kw, kb = jax.random.split(key, 3)
    x = jax.random.normal(kx, (B, C, H, W), dtype=jnp.float32)
    weight = 0.02 * jax.random.normal(kw, (E, C, patch[0], patch[1]),
                                      dtype=jnp.float32)
    bias = 0.01 * jax.random.normal(kb, (E,), dtype=jnp.float32)

    ref = np.asarray(patch_embed_reference(x, weight, bias, patch))
    num_patches = (H // patch[0]) * (W // patch[1])

    # Fast path: bf16 MXU inputs, f32 accumulation; parameter transform hoisted.
    params_bf16 = prepare_patch_embed_params(weight, bias, jnp.bfloat16)
    out = jax.block_until_ready(
        patch_embed(x, weight, bias, patch, params=params_bf16))
    assert out.shape == (B, num_patches, E), out.shape
    np.testing.assert_allclose(np.asarray(out), ref, rtol=2e-2, atol=2e-2)

    # NHWC path: no wrapper transpose/cast; f32 tiles are cast to bf16 on-chip.
    x_nhwc = jnp.transpose(x, (0, 2, 3, 1))
    out_nhwc = jax.block_until_ready(
        patch_embed(x_nhwc, weight, bias, patch, input_format="NHWC",
                    params=params_bf16))
    np.testing.assert_allclose(np.asarray(out_nhwc), ref, rtol=2e-2, atol=2e-2)

    # Exact f32 path to verify the fused im2col rearrangement.
    out_f32 = jax.block_until_ready(
        patch_embed(x, weight, bias, patch, compute_dtype=jnp.float32))
    np.testing.assert_allclose(np.asarray(out_f32), ref, rtol=1e-5, atol=1e-5)

    print("KERNEL_OK")
</pallas_src>

<mosaic_0001>
module attributes {stable_mosaic.version = 11 : i64} {
  func.func @_patch_embed_kernel_fused(%arg0: i32, %arg1: memref<4x4x4x16xbf16, #tpu.memory_space<vmem>>, %arg2: memref<64x128xbf16, #tpu.memory_space<vmem>>, %arg3: memref<1x128xf32, #tpu.memory_space<vmem>>, %arg4: memref<4x4x128xf32, #tpu.memory_space<vmem>>) attributes {dimension_semantics = [#tpu.dimension_semantics<parallel>], iteration_bounds = array<i64: 2>, scalar_prefetch = 0 : i64, scratch_operands = 0 : i64, tpu.core_type = #tpu.core_type<tc>, window_params = [{transform_indices = @transform_0, window_bounds = array<i64: 4, 4, 4, 16>}, {pipeline_mode = #tpu.pipeline_mode<synchronous>, transform_indices = @transform_1, window_bounds = array<i64: 64, 128>}, {pipeline_mode = #tpu.pipeline_mode<synchronous>, transform_indices = @transform_2, window_bounds = array<i64: 1, 128>}, {transform_indices = @transform_3, window_bounds = array<i64: 4, 4, 128>}]} {
    %c0 = arith.constant 0 : index
    %c0_0 = arith.constant 0 : index
    %c0_1 = arith.constant 0 : index
    %c0_2 = arith.constant 0 : index
    %0 = vector.load %arg1[%c0, %c0_0, %c0_1, %c0_2] : memref<4x4x4x16xbf16, #tpu.memory_space<vmem>>, vector<4x4x4x16xbf16>
    %1 = vector.extract_strided_slice %0 {offsets = [0, 0, 0, 0], sizes = [4, 1, 4, 16], strides = [1, 1, 1, 1]} : vector<4x4x4x16xbf16> to vector<4x1x4x16xbf16>
    %2 = vector.shape_cast %1 : vector<4x1x4x16xbf16> to vector<4x4x16xbf16>
    %3 = vector.extract_strided_slice %0 {offsets = [0, 1, 0, 0], sizes = [4, 1, 4, 16], strides = [1, 1, 1, 1]} : vector<4x4x4x16xbf16> to vector<4x1x4x16xbf16>
    %4 = vector.shape_cast %3 : vector<4x1x4x16xbf16> to vector<4x4x16xbf16>
    %5 = vector.extract_strided_slice %0 {offsets = [0, 2, 0, 0], sizes = [4, 1, 4, 16], strides = [1, 1, 1, 1]} : vector<4x4x4x16xbf16> to vector<4x1x4x16xbf16>
    %6 = vector.shape_cast %5 : vector<4x1x4x16xbf16> to vector<4x4x16xbf16>
    %7 = vector.extract_strided_slice %0 {offsets = [0, 3, 0, 0], sizes = [4, 1, 4, 16], strides = [1, 1, 1, 1]} : vector<4x4x4x16xbf16> to vector<4x1x4x16xbf16>
    %8 = vector.shape_cast %7 : vector<4x1x4x16xbf16> to vector<4x4x16xbf16>
    %9 = tpu.concatenate %2, %4, %6, %8 in 2 : vector<4x4x16xbf16>, vector<4x4x16xbf16>, vector<4x4x16xbf16>, vector<4x4x16xbf16> -> vector<4x4x64xbf16>
    %10 = vector.shape_cast %9 : vector<4x4x64xbf16> to vector<16x64xbf16>
    %c0_3 = arith.constant 0 : index
    %c0_4 = arith.constant 0 : index
    %11 = vector.load %arg2[%c0_3, %c0_4] : memref<64x128xbf16, #tpu.memory_space<vmem>>, vector<64x128xbf16>
    %cst = arith.constant dense<0.000000e+00> : vector<16x128xf32>
    %12 = tpu.matmul %10, %11, %cst {dimension_numbers = #tpu.dot_dimension_numbers<[1], [0], [0], [1], [0, 0, 1, 1], [], []>} : vector<16x64xbf16>, vector<64x128xbf16>, vector<16x128xf32> -> vector<16x128xf32>
    %c0_5 = arith.constant 0 : index
    %c0_6 = arith.constant 0 : index
    %13 = vector.load %arg3[%c0_5, %c0_6] : memref<1x128xf32, #tpu.memory_space<vmem>>, vector<1x128xf32>
    %14 = vector.broadcast %13 : vector<1x128xf32> to vector<16x128xf32>
    %15 = arith.addf %12, %14 : vector<16x128xf32>
    %16 = vector.shape_cast %15 : vector<16x128xf32> to vector<4x4x128xf32>
    %c0_7 = arith.constant 0 : index
    %c0_8 = arith.constant 0 : index
    %c0_9 = arith.constant 0 : index
    %17 = vector.load %arg4[%c0_7, %c0_8, %c0_9] : memref<4x4x128xf32, #tpu.memory_space<vmem>>, vector<4x4x128xf32>
    tpu.vector_store %arg4[%c0_7, %c0_8, %c0_9], %16 {strides = array<i32>} : memref<4x4x128xf32, #tpu.memory_space<vmem>>, vector<4x4x128xf32>,
    return
  }
  func.func @transform_0(%arg0: i32) -> (i32, i32, i32, i32) {
    %c0_i32 = arith.constant 0 : i32
    %c0_i32_0 = arith.constant 0 : i32
    %c0_i32_1 = arith.constant 0 : i32
    %c0_i32_2 = arith.constant 0 : i32
    return %arg0, %c0_i32, %c0_i32_0, %c0_i32_1 : i32, i32, i32, i32
  }
  func.func @transform_1(%arg0: i32) -> (i32, i32) {
    %c0_i32 = arith.constant 0 : i32
    %c0_i32_0 = arith.constant 0 : i32
    %c0_i32_1 = arith.constant 0 : i32
    return %c0_i32, %c0_i32_0 : i32, i32
  }
  func.func @transform_2(%arg0: i32) -> (i32, i32) {
    %c0_i32 = arith.constant 0 : i32
    %c0_i32_0 = arith.constant 0 : i32
    %c0_i32_1 = arith.constant 0 : i32
    return %c0_i32, %c0_i32_0 : i32, i32
  }
  func.func @transform_3(%arg0: i32) -> (i32, i32, i32) {
    %c0_i32 = arith.constant 0 : i32
    %c0_i32_0 = arith.constant 0 : i32
    %c0_i32_1 = arith.constant 0 : i32
    return %arg0, %c0_i32, %c0_i32_0 : i32, i32, i32
  }
}

module attributes {stable_mosaic.version = 11 : i64} {
  func.func @_patch_embed_kernel_looped(%arg0: i32, %arg1: memref<4x4x4x16xbf16, #tpu.memory_space<vmem>>, %arg2: memref<64x128xbf16, #tpu.memory_space<vmem>>, %arg3: memref<1x128xf32, #tpu.memory_space<vmem>>, %arg4: memref<4x4x128xf32, #tpu.memory_space<vmem>>) attributes {dimension_semantics = [#tpu.dimension_semantics<parallel>], iteration_bounds = array<i64: 2>, scalar_prefetch = 0 : i64, scratch_operands = 0 : i64, tpu.core_type = #tpu.core_type<tc>, window_params = [{transform_indices = @transform_0, window_bounds = array<i64: 4, 4, 4, 16>}, {pipeline_mode = #tpu.pipeline_mode<synchronous>, transform_indices = @transform_1, window_bounds = array<i64: 64, 128>}, {pipeline_mode = #tpu.pipeline_mode<synchronous>, transform_indices = @transform_2, window_bounds = array<i64: 1, 128>}, {transform_indices = @transform_3, window_bounds = array<i64: 4, 4, 128>}]} {
    %c0 = arith.constant 0 : index
    %c0_0 = arith.constant 0 : index
    %c0_1 = arith.constant 0 : index
    %c0_2 = arith.constant 0 : index
    %0 = vector.load %arg1[%c0, %c0_0, %c0_1, %c0_2] : memref<4x4x4x16xbf16, #tpu.memory_space<vmem>>, vector<4x4x4x16xbf16>
    %c0_3 = arith.constant 0 : index
    %c0_4 = arith.constant 0 : index
    %1 = vector.load %arg2[%c0_3, %c0_4] : memref<64x128xbf16, #tpu.memory_space<vmem>>, vector<64x128xbf16>
    %2 = vector.extract_strided_slice %0 {offsets = [0, 0, 0, 0], sizes = [4, 1, 4, 16], strides = [1, 1, 1, 1]} : vector<4x4x4x16xbf16> to vector<4x1x4x16xbf16>
    %3 = vector.shape_cast %2 : vector<4x1x4x16xbf16> to vector<4x4x16xbf16>
    %4 = vector.shape_cast %3 : vector<4x4x16xbf16> to vector<16x16xbf16>
    %5 = vector.extract_strided_slice %1 {offsets = [0, 0], sizes = [16, 128], strides = [1, 1]} : vector<64x128xbf16> to vector<16x128xbf16>
    %cst = arith.constant dense<0.000000e+00> : vector<16x128xf32>
    %6 = tpu.matmul %4, %5, %cst {dimension_numbers = #tpu.dot_dimension_numbers<[1], [0], [0], [1], [0, 0, 1, 1], [], []>} : vector<16x16xbf16>, vector<16x128xbf16>, vector<16x128xf32> -> vector<16x128xf32>
    %7 = vector.extract_strided_slice %0 {offsets = [0, 1, 0, 0], sizes = [4, 1, 4, 16], strides = [1, 1, 1, 1]} : vector<4x4x4x16xbf16> to vector<4x1x4x16xbf16>
    %8 = vector.shape_cast %7 : vector<4x1x4x16xbf16> to vector<4x4x16xbf16>
    %9 = vector.shape_cast %8 : vector<4x4x16xbf16> to vector<16x16xbf16>
    %10 = vector.extract_strided_slice %1 {offsets = [16, 0], sizes = [16, 128], strides = [1, 1]} : vector<64x128xbf16> to vector<16x128xbf16>
    %cst_5 = arith.constant dense<0.000000e+00> : vector<16x128xf32>
    %11 = tpu.matmul %9, %10, %cst_5 {dimension_numbers = #tpu.dot_dimension_numbers<[1], [0], [0], [1], [0, 0, 1, 1], [], []>} : vector<16x16xbf16>, vector<16x128xbf16>, vector<16x128xf32> -> vector<16x128xf32>
    %12 = arith.addf %6, %11 : vector<16x128xf32>
    %13 = vector.extract_strided_slice %0 {offsets = [0, 2, 0, 0], sizes = [4, 1, 4, 16], strides = [1, 1, 1, 1]} : vector<4x4x4x16xbf16> to vector<4x1x4x16xbf16>
    %14 = vector.shape_cast %13 : vector<4x1x4x16xbf16> to vector<4x4x16xbf16>
    %15 = vector.shape_cast %14 : vector<4x4x16xbf16> to vector<16x16xbf16>
    %16 = vector.extract_strided_slice %1 {offsets = [32, 0], sizes = [16, 128], strides = [1, 1]} : vector<64x128xbf16> to vector<16x128xbf16>
    %cst_6 = arith.constant dense<0.000000e+00> : vector<16x128xf32>
    %17 = tpu.matmul %15, %16, %cst_6 {dimension_numbers = #tpu.dot_dimension_numbers<[1], [0], [0], [1], [0, 0, 1, 1], [], []>} : vector<16x16xbf16>, vector<16x128xbf16>, vector<16x128xf32> -> vector<16x128xf32>
    %18 = arith.addf %12, %17 : vector<16x128xf32>
    %19 = vector.extract_strided_slice %0 {offsets = [0, 3, 0, 0], sizes = [4, 1, 4, 16], strides = [1, 1, 1, 1]} : vector<4x4x4x16xbf16> to vector<4x1x4x16xbf16>
    %20 = vector.shape_cast %19 : vector<4x1x4x16xbf16> to vector<4x4x16xbf16>
    %21 = vector.shape_cast %20 : vector<4x4x16xbf16> to vector<16x16xbf16>
    %22 = vector.extract_strided_slice %1 {offsets = [48, 0], sizes = [16, 128], strides = [1, 1]} : vector<64x128xbf16> to vector<16x128xbf16>
    %cst_7 = arith.constant dense<0.000000e+00> : vector<16x128xf32>
    %23 = tpu.matmul %21, %22, %cst_7 {dimension_numbers = #tpu.dot_dimension_numbers<[1], [0], [0], [1], [0, 0, 1, 1], [], []>} : vector<16x16xbf16>, vector<16x128xbf16>, vector<16x128xf32> -> vector<16x128xf32>
    %24 = arith.addf %18, %23 : vector<16x128xf32>
    %c0_8 = arith.constant 0 : index
    %c0_9 = arith.constant 0 : index
    %25 = vector.load %arg3[%c0_8, %c0_9] : memref<1x128xf32, #tpu.memory_space<vmem>>, vector<1x128xf32>
    %26 = vector.broadcast %25 : vector<1x128xf32> to vector<16x128xf32>
    %27 = arith.addf %24, %26 : vector<16x128xf32>
    %28 = vector.shape_cast %27 : vector<16x128xf32> to vector<4x4x128xf32>
    %c0_10 = arith.constant 0 : index
    %c0_11 = arith.constant 0 : index
    %c0_12 = arith.constant 0 : index
    %29 = vector.load %arg4[%c0_10, %c0_11, %c0_12] : memref<4x4x128xf32, #tpu.memory_space<vmem>>, vector<4x4x128xf32>
    tpu.vector_store %arg4[%c0_10, %c0_11, %c0_12], %28 {strides = array<i32>} : memref<4x4x128xf32, #tpu.memory_space<vmem>>, vector<4x4x128xf32>,
    return
  }
  func.func @transform_0(%arg0: i32) -> (i32, i32, i32, i32) {
    %c0_i32 = arith.constant 0 : i32
    %c0_i32_0 = arith.constant 0 : i32
    %c0_i32_1 = arith.constant 0 : i32
    %c0_i32_2 = arith.constant 0 : i32
    return %arg0, %c0_i32, %c0_i32_0, %c0_i32_1 : i32, i32, i32, i32
  }
  func.func @transform_1(%arg0: i32) -> (i32, i32) {
    %c0_i32 = arith.constant 0 : i32
    %c0_i32_0 = arith.constant 0 : i32
    %c0_i32_1 = arith.constant 0 : i32
    return %c0_i32, %c0_i32_0 : i32, i32
  }
  func.func @transform_2(%arg0: i32) -> (i32, i32) {
    %c0_i32 = arith.constant 0 : i32
    %c0_i32_0 = arith.constant 0 : i32
    %c0_i32_1 = arith.constant 0 : i32
    return %c0_i32, %c0_i32_0 : i32, i32
  }
  func.func @transform_3(%arg0: i32) -> (i32, i32, i32) {
    %c0_i32 = arith.constant 0 : i32
    %c0_i32_0 = arith.constant 0 : i32
    %c0_i32_1 = arith.constant 0 : i32
    return %arg0, %c0_i32, %c0_i32_0 : i32, i32, i32
  }
}

</mosaic_0001>

<llo_original>
// kernel: tpu_custom_call.1
$region0: #{tpu_custom_call.1}
  #allocation0 [shape = 'u32[]', space=smem, size = 0x4, offset = 0x4, fixed_abs, tag = 'smem constant byte address 0x4 - core index']
  #allocation1 [shape = 'u32[144,128]{1,0:T(1,128)}', space=vmem, size = 0x12000, scoped, tag = 'internal scratch']
  %s0 = inlined_call_operand.hbm [shape: bf16[8,4,4,16], index: 0, kind: input, shape index: {}]
  %s1 = inlined_call_operand.hbm [shape: bf16[64,128], index: 1, kind: input, shape index: {}]
  %s2 = inlined_call_operand.vmem [shape: f32[1,128], index: 2, kind: input, shape index: {}]
  %s3 = inlined_call_operand.hbm [shape: f32[8,4,128], index: 3, kind: output, shape index: {}]
  %s4 = sld [smem:[#allocation0]]
  $region53: #{tpu_custom_call.1} parent=0
    _
  %s6 = ssub.s32 1, %s4
  %s7 = scalar_select 0, %s6, %s4
  $region1: #{tpu_custom_call.1} parent=0
    #allocation2 [shape = 'u8[32768]{0}', space=vmem, size = 0x8000, scoped, tag = 'input window, operand 0']
    #allocation3 [shape = 's32[2]{0}', space=sflag, size = 0x8, scoped, tag = 'scoped memory for tpu_custom_call.1']
    #allocation4 [shape = 's32[2]{0}', space=sflag, size = 0x8, scoped, tag = 'scoped memory for tpu_custom_call.1']
    #allocation5 [shape = 'u8[16384]{0}', space=vmem, size = 0x4000, scoped, tag = 'input window, operand 1, single buffered']
    #allocation6 [shape = 's32[1]{0}', space=sflag, size = 0x4, scoped, tag = 'scoped memory for tpu_custom_call.1']
    #allocation7 [shape = 'u8[16384]{0}', space=vmem, size = 0x4000, scoped, tag = 'output window, operand 0']
    %8 = vsyncpa [#allocation3], 0
    %s9 = scalar_lea.sflag [#allocation3], 1
    %10 = vsyncpa %s9, 0
    %11 = vsyncpa [#allocation6], 0
    %12 = vsyncpa [#allocation4], 0
    %s13 = scalar_lea.sflag [#allocation4], 1
    %14 = vsyncpa %s13, 0
    loop: start=0, step=1, limit=4
    $region2: #{tpu_custom_call.1} parent=1 // loop_pre_header
      _
    $region3: #{tpu_custom_call.1} parent=1 // loop_header
      %s16 = sphi 0, %s20
      %p17 = scmp.ge.s32.totalorder %s16, 4
      %s26 = sphi 0, %s28
      %s29 = sphi 0, %s26
      %s30 = sphi 0, %s29
      %s46 = sphi 0, %s30
      %s50 = sphi 0, %s50
      %s52 = sphi 0, %s50
      %s53 = sphi 0, %s52
      %s67 = sphi 0, %s53
      %s71 = sphi 0, %s71
      %s73 = sphi 0, %s71
      %s74 = sphi 0, %s73
      %s88 = sphi 0, %s74
      %s94 = sphi 0, %s96
      %s97 = sphi 0, %s94
      %s98 = sphi 0, %s97
      %s114 = sphi 0, %s98
    $region4: #{tpu_custom_call.1} parent=1 // loop_header_branch
      %19 = sbr.rel (%p17) target = $region8
    $region5: #{tpu_custom_call.1} parent=1 // loop_body
      %s21 = ssub.s32 %s16, 1
      %s22 = ssub.s32 %s16, 2
      %s23 = sadd.s32 %s16, 1
      %s24 = ssub.s32 %s16, %s23
      %p25 = scmp.eq.s32.totalorder %s24, 0
      %s27 = sadd.s32 %s26, 1
      %s28 = scalar_select %p25, %s26, %s27
      %p31 = pneg %p25
      %p32 = scmp.eq.s32.totalorder %s16, 1
      %p33 = por %p31, %p32
      %p34 = scmp.ne.s32.totalorder %s26, %s29
      %p35 = scmp.eq.s32.totalorder %s16, 0
      %p36 = por %p34, %p35
      %p37 = scmp.ne.s32.totalorder %s26, %s29
      %p38 = scmp.eq.s32.totalorder %s21, 1
      %p39 = por %p37, %p38
      %p40 = scmp.ne.s32.totalorder %s29, %s30
      %p41 = scmp.eq.s32.totalorder %s21, 0
      %p42 = por %p40, %p41
      %p43 = scmp.ne.s32.totalorder %s29, %s30
      %p44 = scmp.eq.s32.totalorder %s22, 1
      %p45 = por %p43, %p44
      %p47 = scmp.ne.s32.totalorder %s30, %s46
      %p48 = scmp.eq.s32.totalorder %s22, 0
      %p49 = por %p47, %p48
      %s51 = sadd.s32 %s50, 1
      %p54 = scmp.eq.s32.totalorder %s16, 1
      %p55 = scmp.ne.s32.totalorder %s50, %s52
      %p56 = scmp.eq.s32.totalorder %s16, 0
      %p57 = por %p55, %p56
      %p58 = scmp.ne.s32.totalorder %s50, %s52
      %p59 = scmp.eq.s32.totalorder %s21, 1
      %p60 = por %p58, %p59
      %p61 = scmp.ne.s32.totalorder %s52, %s53
      %p62 = scmp.eq.s32.totalorder %s21, 0
      %p63 = por %p61, %p62
      %p64 = scmp.ne.s32.totalorder %s52, %s53
      %p65 = scmp.eq.s32.totalorder %s22, 1
      %p66 = por %p64, %p65
      %p68 = scmp.ne.s32.totalorder %s53, %s67
      %p69 = scmp.eq.s32.totalorder %s22, 0
      %p70 = por %p68, %p69
      %s72 = sadd.s32 %s71, 1
      %p75 = scmp.eq.s32.totalorder %s16, 1
      %p76 = scmp.ne.s32.totalorder %s71, %s73
      %p77 = scmp.eq.s32.totalorder %s16, 0
      %p78 = por %p76, %p77
      %p79 = scmp.ne.s32.totalorder %s71, %s73
      %p80 = scmp.eq.s32.totalorder %s21, 1
      %p81 = por %p79, %p80
      %p82 = scmp.ne.s32.totalorder %s73, %s74
      %p83 = scmp.eq.s32.totalorder %s21, 0
      %p84 = por %p82, %p83
      %p85 = scmp.ne.s32.totalorder %s73, %s74
      %p86 = scmp.eq.s32.totalorder %s22, 1
      %p87 = por %p85, %p86
      %p89 = scmp.ne.s32.totalorder %s74, %s88
      %p90 = scmp.eq.s32.totalorder %s22, 0
      %p91 = por %p89, %p90
      %s92 = ssub.s32 %s16, %s23
      %p93 = scmp.eq.s32.totalorder %s92, 0
      %s95 = sadd.s32 %s94, 1
      %s96 = scalar_select %p93, %s94, %s95
      %p99 = pneg %p93
      %p100 = scmp.eq.s32.totalorder %s16, 1
      %p101 = por %p99, %p100
      %p102 = scmp.ne.s32.totalorder %s94, %s97
      %p103 = scmp.eq.s32.totalorder %s16, 0
      %p104 = por %p102, %p103
      %p105 = scmp.ne.s32.totalorder %s94, %s97
      %p106 = scmp.eq.s32.totalorder %s21, 1
      %p107 = por %p105, %p106
      %p108 = scmp.ne.s32.totalorder %s97, %s98
      %p109 = scmp.eq.s32.totalorder %s21, 0
      %p110 = por %p108, %p109
      %p111 = scmp.ne.s32.totalorder %s97, %s98
      %p112 = scmp.eq.s32.totalorder %s22, 1
      %p113 = por %p111, %p112
      %p115 = scmp.ne.s32.totalorder %s98, %s114
      %p116 = scmp.eq.s32.totalorder %s22, 0
      %p117 = por %p115, %p116
      %p118 = scmp.le.s32.totalorder 1, %s16
      %p119 = scmp.lt.s32.totalorder %s16, 3
      %p120 = pnand %p118, %p119
      %p121 = pneg %p120
      // Predicated region
      $region9: #{tpu_custom_call.1} parent=5 // pred_check
        _
      $region10: #{tpu_custom_call.1} parent=5 // pred_check_branch
        %123 = sbr.rel (%p120) target = $region12
      $region11: #{tpu_custom_call.1} parent=5 // pred_region
        %s124 = ssub.s32 %s16, 1
        // Predicated region
        $region13: #{tpu_custom_call.1} parent=11 // pred_check
          %p125 = pneg %p63
        $region14: #{tpu_custom_call.1} parent=11 // pred_check_branch
          %127 = sbr.rel (%p125) target = $region16
        $region15: #{tpu_custom_call.1} parent=11 // pred_region
          %s129 = ssub.s32 512, 512
          %130 = vsyncadd [#allocation6], %s129
          %s131 = sshll.u32 [#allocation5], 4
          %s132 = int_to_ptr.vmem [resolvable:$true] %s131
          %137 = dma.hbm_to_vmem [thread:$0]  %s1, 512, %s132, [#allocation6], 64, 64, 4
        $region16: #{tpu_custom_call.1} parent=11 // pred_fallthru
          _
        // Predicated region
        $region17: #{tpu_custom_call.1} parent=11 // pred_check
          %p138 = pneg %p84
        $region18: #{tpu_custom_call.1} parent=11 // pred_check_branch
          %140 = sbr.rel (%p138) target = $region20
        $region19: #{tpu_custom_call.1} parent=11 // pred_region
          _
        $region20: #{tpu_custom_call.1} parent=11 // pred_fallthru
          _
      $region12: #{tpu_custom_call.1} parent=5 // pred_fallthru
        _
      %p141 = scmp.lt.s32.totalorder %s16, 2
      // Predicated region
      $region21: #{tpu_custom_call.1} parent=5 // pred_check
        %p142 = pneg %p141
      $region22: #{tpu_custom_call.1} parent=5 // pred_check_branch
        %144 = sbr.rel (%p142) target = $region24
      $region23: #{tpu_custom_call.1} parent=5 // pred_region
        // Predicated region
        $region25: #{tpu_custom_call.1} parent=23 // pred_check
          %p145 = pneg %p36
        $region26: #{tpu_custom_call.1} parent=23 // pred_check_branch
          %147 = sbr.rel (%p145) target = $region28
        $region27: #{tpu_custom_call.1} parent=23 // pred_region
          %s148 = sand.u32 %s26, 1
          %s149 = scalar_lea.sflag [#allocation3], %s148
          %s150 = sand.u32 %s26, 1
          %s151 = smul.addr %s150, 32
          %s152 = scalar_lea.vmem [#allocation2], %s151
          %s153 = smul.u32 4, %s16
          %s155 = ssub.s32 512, 512
          %156 = vsyncadd %s149, %s155
          %s157 = smul.addr %s153, 4
          %s158 = smul.addr %s157, 32
          %s159 = scalar_lea.hbm %s0, %s158
          %s160 = sshll.u32 %s152, 4
          %s161 = int_to_ptr.vmem [resolvable:$true] %s160
          %166 = dma.hbm_to_vmem [thread:$0]  %s159, 512, %s161, %s149, 32, 32, 2
        $region28: #{tpu_custom_call.1} parent=23 // pred_fallthru
          _
      $region24: #{tpu_custom_call.1} parent=5 // pred_fallthru
        _
      %p167 = scmp.le.s32.totalorder 1, %s16
      %p168 = scmp.lt.s32.totalorder %s16, 3
      %p169 = pnand %p167, %p168
      %p170 = pneg %p169
      // Predicated region
      $region29: #{tpu_custom_call.1} parent=5 // pred_check
        _
      $region30: #{tpu_custom_call.1} parent=5 // pred_check_branch
        %172 = sbr.rel (%p169) target = $region32
      $region31: #{tpu_custom_call.1} parent=5 // pred_region
        %s173 = ssub.s32 %s16, 1
        %s174 = sand.u32 %s29, 1
        %s175 = scalar_lea.sflag [#allocation3], %s174
        %s176 = sand.u32 %s29, 1
        %s177 = smul.addr %s176, 32
        %s178 = scalar_lea.vmem [#allocation2], %s177
        // Predicated region
        $region33: #{tpu_custom_call.1} parent=31 // pred_check
          %p179 = pneg %p42
        $region34: #{tpu_custom_call.1} parent=31 // pred_check_branch
          %181 = sbr.rel (%p179) target = $region36
        $region35: #{tpu_custom_call.1} parent=31 // pred_region
          %182 = dma.done %s175, 512
        $region36: #{tpu_custom_call.1} parent=31 // pred_fallthru
          _
        // Predicated region
        $region37: #{tpu_custom_call.1} parent=31 // pred_check
          %p183 = pneg %p63
        $region38: #{tpu_custom_call.1} parent=31 // pred_check_branch
          %185 = sbr.rel (%p183) target = $region40
        $region39: #{tpu_custom_call.1} parent=31 // pred_region
          %186 = dma.done [#allocation6], 512
        $region40: #{tpu_custom_call.1} parent=31 // pred_fallthru
          _
        %s187 = sand.u32 %s29, 1
        %s188 = scalar_lea.sflag [#allocation3], %s187
        %s189 = sand.u32 %s29, 1
        %s190 = smul.addr %s189, 32
        %s191 = scalar_lea.vmem [#allocation2], %s190
        %p192 = pneg %p42
        %p193 = pneg %p39
        %p194 = pneg %p63
        %p195 = pneg %p60
        %p196 = pneg %p84
        %p197 = pneg %p81
        %p198 = pneg %p110
        %p199 = pneg %p107
        %s200 = sand.u32 %s97, 1
        %s201 = scalar_lea.sflag [#allocation4], %s200
        %s202 = sand.u32 %s97, 1
        %s203 = smul.addr %s202, 16
        %s204 = scalar_lea.vmem [#allocation7], %s203
        %s205 = smul.u32 4, %s21
        %s206 = smul.u32 4, %s21
        %v208 = vld [vmem:[%s178] sm:$0x3]
        %v209 = vld [vmem:[%s178 + $0x2] sm:$0x3]
        %v210 = vld [vmem:[%s178 + $0x4] sm:$0x3]
        %v211 = vld [vmem:[%s178 + $0x6] sm:$0x3]
        %v212 = vld [vmem:[%s178 + $0x8] sm:$0x3]
        %v213 = vld [vmem:[%s178 + $0xa] sm:$0x3]
        %v214 = vld [vmem:[%s178 + $0xc] sm:$0x3]
        %v215 = vld [vmem:[%s178 + $0xe] sm:$0x3]
        %v216 = vld [vmem:[%s178 + $0x10] sm:$0x3]
        %v217 = vld [vmem:[%s178 + $0x12] sm:$0x3]
        %v218 = vld [vmem:[%s178 + $0x14] sm:$0x3]
        %v219 = vld [vmem:[%s178 + $0x16] sm:$0x3]
        %v220 = vld [vmem:[%s178 + $0x18] sm:$0x3]
        %v221 = vld [vmem:[%s178 + $0x1a] sm:$0x3]
        %v222 = vld [vmem:[%s178 + $0x1c] sm:$0x3]
        %v223 = vld [vmem:[%s178 + $0x1e] sm:$0x3]
        %v229 = vunpack.c.l.s4 1983009808
        %v230 = vunpack.c.0.s8 %v229
        %v231 = vlaneseq
        %v232 = vshrl.u32 %v231, 7
        %v233 = vsub.s32 %v230, %v232
        %v234 = vrot.slane %v209, %v233
        %v236 = vunpack.c.l.s4 1983009808
        %v237 = vunpack.c.0.s8 %v236
        %v238 = vlaneseq
        %v239 = vshrl.u32 %v238, 7
        %v240 = vsub.s32 %v237, %v239
        %v241 = vrot.slane %v213, %v240
        %v243 = vunpack.c.l.s4 1983009808
        %v244 = vunpack.c.0.s8 %v243
        %v245 = vlaneseq
        %v246 = vshrl.u32 %v245, 7
        %v247 = vsub.s32 %v244, %v246
        %v248 = vrot.slane %v217, %v247
        %v250 = vunpack.c.l.s4 1983009808
        %v251 = vunpack.c.0.s8 %v250
        %v252 = vlaneseq
        %v253 = vshrl.u32 %v252, 7
        %v254 = vsub.s32 %v251, %v253
        %v255 = vrot.slane %v221, %v254
        %256 = vrot.lane.b32.xlu0 %v234, 16
        %v257 = vpop.permute.xlu0 %256
        %258 = vrot.lane.b32.xlu0 %v241, 16
        %v259 = vpop.permute.xlu0 %258
        %260 = vrot.lane.b32.xlu0 %v248, 16
        %v261 = vpop.permute.xlu0 %260
        %262 = vrot.lane.b32.xlu0 %v255, 16
        %v263 = vpop.permute.xlu0 %262
        %v269 = vunpack.c.l.s4 1983009808
        %v270 = vunpack.c.0.s8 %v269
        %v271 = vlaneseq
        %v272 = vshrl.u32 %v271, 7
        %v273 = vsub.s32 %v270, %v272
        %v274 = vrot.slane %v210, %v273
        %v276 = vunpack.c.l.s4 1983009808
        %v277 = vunpack.c.0.s8 %v276
        %v278 = vlaneseq
        %v279 = vshrl.u32 %v278, 7
        %v280 = vsub.s32 %v277, %v279
        %v281 = vrot.slane %v214, %v280
        %v283 = vunpack.c.l.s4 1983009808
        %v284 = vunpack.c.0.s8 %v283
        %v285 = vlaneseq
        %v286 = vshrl.u32 %v285, 7
        %v287 = vsub.s32 %v284, %v286
        %v288 = vrot.slane %v218, %v287
        %v290 = vunpack.c.l.s4 1983009808
        %v291 = vunpack.c.0.s8 %v290
        %v292 = vlaneseq
        %v293 = vshrl.u32 %v292, 7
        %v294 = vsub.s32 %v291, %v293
        %v295 = vrot.slane %v222, %v294
        %296 = vrot.lane.b32.xlu0 %v274, 32
        %v297 = vpop.permute.xlu0 %296
        %298 = vrot.lane.b32.xlu0 %v281, 32
        %v299 = vpop.permute.xlu0 %298
        %300 = vrot.lane.b32.xlu0 %v288, 32
        %v301 = vpop.permute.xlu0 %300
        %302 = vrot.lane.b32.xlu0 %v295, 32
        %v303 = vpop.permute.xlu0 %302
        %v309 = vunpack.c.l.s4 1983009808
        %v310 = vunpack.c.0.s8 %v309
        %v311 = vlaneseq
        %v312 = vshrl.u32 %v311, 7
        %v313 = vsub.s32 %v310, %v312
        %v314 = vrot.slane %v211, %v313
        %v316 = vunpack.c.l.s4 1983009808
        %v317 = vunpack.c.0.s8 %v316
        %v318 = vlaneseq
        %v319 = vshrl.u32 %v318, 7
        %v320 = vsub.s32 %v317, %v319
        %v321 = vrot.slane %v215, %v320
        %v323 = vunpack.c.l.s4 1983009808
        %v324 = vunpack.c.0.s8 %v323
        %v325 = vlaneseq
        %v326 = vshrl.u32 %v325, 7
        %v327 = vsub.s32 %v324, %v326
        %v328 = vrot.slane %v219, %v327
        %v330 = vunpack.c.l.s4 1983009808
        %v331 = vunpack.c.0.s8 %v330
        %v332 = vlaneseq
        %v333 = vshrl.u32 %v332, 7
        %v334 = vsub.s32 %v331, %v333
        %v335 = vrot.slane %v223, %v334
        %336 = vrot.lane.b32.xlu0 %v314, 48
        %v337 = vpop.permute.xlu0 %336
        %338 = vrot.lane.b32.xlu0 %v321, 48
        %v339 = vpop.permute.xlu0 %338
        %340 = vrot.lane.b32.xlu0 %v328, 48
        %v341 = vpop.permute.xlu0 %340
        %342 = vrot.lane.b32.xlu0 %v335, 48
        %v343 = vpop.permute.xlu0 %342
        %vm344 = vcmask 130048
        %v347 = vsel %vm344, %v208, %v257
        %v350 = vsel %vm344, %v212, %v259
        %v353 = vsel %vm344, %v216, %v261
        %v356 = vsel %vm344, %v220, %v263
        %vm357 = vcmask 261120
        %v359 = vsel %vm357, %v347, %v297
        %v361 = vsel %vm357, %v350, %v299
        %v363 = vsel %vm357, %v353, %v301
        %v365 = vsel %vm357, %v356, %v303
        %vm366 = vcmask 392192
        %v368 = vsel %vm366, %v359, %v337
        %v370 = vsel %vm366, %v361, %v339
        %v372 = vsel %vm366, %v363, %v341
        %v374 = vsel %vm366, %v365, %v343
        %v375 = vld [vmem:[#allocation5] sm:$0xf]
        %v376 = vld [vmem:[#allocation5 + $0x4] sm:$0xf]
        %v377 = vld [vmem:[#allocation5 + $0x8] sm:$0xf]
        %v378 = vld [vmem:[#allocation5 + $0xc] sm:$0xf]
        %v379 = vld [vmem:[#allocation5 + $0x10] sm:$0xf]
        %v380 = vld [vmem:[#allocation5 + $0x14] sm:$0xf]
        %v381 = vld [vmem:[#allocation5 + $0x18] sm:$0xf]
        %v382 = vld [vmem:[#allocation5 + $0x1c] sm:$0xf]
        %v383 = vld [vmem:[%s2] sm:$0x1]
        %v385 = vlaneseq
        %v386 = vshrl.u32 %v385, 7
        %v387 = vsub.s32 0, %v386
        %v388 = vrot.slane %v383, %v387
        %v394 = vcombine.low %v368, %v370
        %v395 = vcombine.low %v372, %v374
        %v397 = vunpack.c.l.s4 1983009808
        %v398 = vunpack.c.0.s8 %v397
        %v399 = vlaneseq
        %v400 = vshrl.u32 %v399, 7
        %v401 = vsub.s32 %v398, %v400
        %v402 = vrot.slane %v394, %v401
        %v404 = vunpack.c.l.s4 1983009808
        %v405 = vunpack.c.0.s8 %v404
        %v406 = vlaneseq
        %v407 = vshrl.u32 %v406, 7
        %v408 = vsub.s32 %v405, %v407
        %v409 = vrot.slane %v395, %v408
        %v410 = vcombine.low %v402, %v409
        %v419 = vunpack.c.l.b16 %v375
        %v420 = vunpack.c.l.b16 %v376
        %v421 = vunpack.c.l.b16 %v377
        %v422 = vunpack.c.l.b16 %v378
        %v423 = vunpack.c.l.b16 %v379
        %v424 = vunpack.c.l.b16 %v380
        %v425 = vunpack.c.l.b16 %v381
        %v426 = vunpack.c.l.b16 %v382
        %v427 = vpack.c.b16 %v420, %v419
        %v428 = vpack.c.b16 %v422, %v421
        %v429 = vpack.c.b16 %v424, %v423
        %v430 = vpack.c.b16 %v426, %v425
        %vm435 = vcmask 523264
        %v437 = vsel %vm435, %v410, 0
        %439 = vmatprep.subr.bf16.mxu0 0
        %440 = vmatpush1.bf16.msra.mxu0 0
        %441 = vmatprep.subr.bf16.mxu0 0
        %442 = vmatpush1.bf16.msra.mxu0 0
        %443 = vmatprep.subr.bf16.mxu0 0
        %444 = vmatpush1.bf16.msra.mxu0 0
        %445 = vmatprep.subr.bf16.mxu0 0
        %446 = vmatpush1.bf16.msra.mxu0 0
        %447 = vmatprep.subr.bf16.mxu0 0
        %448 = vmatpush1.bf16.msra.mxu0 %v430
        %449 = vmatprep.subr.bf16.mxu0 0
        %450 = vmatpush1.bf16.msra.mxu0 %v429
        %451 = vmatprep.subr.bf16.mxu0 0
        %452 = vmatpush1.bf16.msra.mxu0 %v428
        %453 = vmatprep.subr.bf16.mxu0 0
        %454 = vmatpush1.bf16.msra.mxu0 %v427
        %455 = vmatprep.subr.bf16.mxu0 0
        %456 = vmatpush2.bf16.msra.mxu0 0
        %457 = vmatprep.subr.bf16.mxu0 0
        %458 = vmatpush2.bf16.msra.mxu0 0
        %459 = vmatprep.subr.bf16.mxu0 0
        %460 = vmatpush2.bf16.msra.mxu0 0
        %461 = vmatprep.subr.bf16.mxu0 0
        %462 = vmatpush2.bf16.msra.mxu0 0
        %463 = vmatprep.subr.bf16.mxu0 0
        %464 = vmatpush2.bf16.msra.mxu0 0
        %465 = vmatprep.subr.bf16.mxu0 0
        %466 = vmatpush2.bf16.msra.mxu0 0
        %467 = vmatprep.subr.bf16.mxu0 0
        %468 = vmatpush2.bf16.msra.mxu0 0
        %469 = vmatprep.subr.bf16.mxu0 0
        %470 = vmatpush2.bf16.msra.mxu0 0
        %471 = vmatprep.mubr.bf16.mxu0 0
        %472 = vmatmul.mubr.bf16.gmra.mxu0 %v437
        %v473 = vpop.f32.mrf.mxu0
        %v474 = vadd.f32 %v388, %v473
        %v475 = vpop.f32.mrf.mxu0
        %v476 = vpop.f32.mrf.mxu0
        %v477 = vadd.f32 %v388, %v476
        %v478 = vpop.f32.mrf.mxu0
        %479 = vdwg.mxu0
        %v482 = vcombine.high %v474, %v474
        %v483 = vcombine.high %v477, %v477
        %486 = vst [vmem:[%s204] sm:$0xf] %v474
        %487 = vst [vmem:[%s204 + $0x4] sm:$0xf] %v482
        %488 = vst [vmem:[%s204 + $0x8] sm:$0xf] %v477
        %489 = vst [vmem:[%s204 + $0xc] sm:$0xf] %v483
        %s490 = sand.u32 %s97, 1
        %s491 = scalar_lea.sflag [#allocation4], %s490
        %s492 = sand.u32 %s97, 1
        %s493 = smul.addr %s492, 16
        %s494 = scalar_lea.vmem [#allocation7], %s493
        // Predicated region
        $region41: #{tpu_custom_call.1} parent=31 // pred_check
          %p495 = pneg %p107
        $region42: #{tpu_custom_call.1} parent=31 // pred_check_branch
          %497 = sbr.rel (%p495) target = $region44
        $region43: #{tpu_custom_call.1} parent=31 // pred_region
          %s498 = smul.u32 4, %s21
          %s500 = ssub.s32 256, 256
          %501 = vsyncadd %s491, %s500
          %s502 = smul.addr %s498, 64
          %s503 = scalar_lea.hbm %s3, %s502
          %s504 = sshll.u32 %s494, 4
          %s505 = int_to_ptr.vmem [resolvable:$true] %s504
          %510 = dma.vmem_to_hbm [thread:$0]  %s505, 256, %s503, %s491, 64, 64, 4
        $region44: #{tpu_custom_call.1} parent=31 // pred_fallthru
          _
      $region32: #{tpu_custom_call.1} parent=5 // pred_fallthru
        _
      %p511 = scmp.le.s32.totalorder 2, %s16
      // Predicated region
      $region45: #{tpu_custom_call.1} parent=5 // pred_check
        %p512 = pneg %p511
      $region46: #{tpu_custom_call.1} parent=5 // pred_check_branch
        %514 = sbr.rel (%p512) target = $region48
      $region47: #{tpu_custom_call.1} parent=5 // pred_region
        %s515 = ssub.s32 %s16, 2
        // Predicated region
        $region49: #{tpu_custom_call.1} parent=47 // pred_check
          %p516 = pneg %p113
        $region50: #{tpu_custom_call.1} parent=47 // pred_check_branch
          %518 = sbr.rel (%p516) target = $region52
        $region51: #{tpu_custom_call.1} parent=47 // pred_region
          %s519 = sand.u32 %s98, 1
          %s520 = scalar_lea.sflag [#allocation4], %s519
          %s521 = sand.u32 %s98, 1
          %s522 = smul.addr %s521, 16
          %s523 = scalar_lea.vmem [#allocation7], %s522
          %524 = dma.done %s520, 256
        $region52: #{tpu_custom_call.1} parent=47 // pred_fallthru
          _
      $region48: #{tpu_custom_call.1} parent=5 // pred_fallthru
        _
    $region6: #{tpu_custom_call.1} parent=1 // loop_footer
      %s20 = sadd.s32 1, %s16
    $region7: #{tpu_custom_call.1} parent=1 // loop_footer_branch
      %15 = sbr.rel target = $region3
    $region8: #{tpu_custom_call.1} parent=1 // loop_exit
      _
    %525 = vsyncpa [#allocation3], 1
    %s526 = scalar_lea.sflag [#allocation3], 1
    %527 = vsyncpa %s526, 1
    %528 = vsyncpa [#allocation6], 1
    %529 = vsyncpa [#allocation4], 1
    %s530 = scalar_lea.sflag [#allocation4], 1
    %531 = vsyncpa %s530, 1

// kernel: tpu_custom_call.1
$region0: #{tpu_custom_call.1}
  #allocation0 [shape = 'u32[]', space=smem, size = 0x4, offset = 0x4, fixed_abs, tag = 'smem constant byte address 0x4 - core index']
  #allocation1 [shape = 'u32[144,128]{1,0:T(1,128)}', space=vmem, size = 0x12000, scoped, tag = 'internal scratch']
  %s0 = inlined_call_operand.hbm [shape: bf16[8,4,4,16], index: 0, kind: input, shape index: {}]
  %s1 = inlined_call_operand.hbm [shape: bf16[64,128], index: 1, kind: input, shape index: {}]
  %s2 = inlined_call_operand.vmem [shape: f32[1,128], index: 2, kind: input, shape index: {}]
  %s3 = inlined_call_operand.hbm [shape: f32[8,4,128], index: 3, kind: output, shape index: {}]
  %s4 = sld [smem:[#allocation0]]
  $region53: #{tpu_custom_call.1} parent=0
    _
  %s6 = ssub.s32 1, %s4
  %s7 = scalar_select 0, %s6, %s4
  $region1: #{tpu_custom_call.1} parent=0
    #allocation2 [shape = 'u8[32768]{0}', space=vmem, size = 0x8000, scoped, tag = 'input window, operand 0']
    #allocation3 [shape = 's32[2]{0}', space=sflag, size = 0x8, scoped, tag = 'scoped memory for tpu_custom_call.1']
    #allocation4 [shape = 's32[2]{0}', space=sflag, size = 0x8, scoped, tag = 'scoped memory for tpu_custom_call.1']
    #allocation5 [shape = 'u8[16384]{0}', space=vmem, size = 0x4000, scoped, tag = 'input window, operand 1, single buffered']
    #allocation6 [shape = 's32[1]{0}', space=sflag, size = 0x4, scoped, tag = 'scoped memory for tpu_custom_call.1']
    #allocation7 [shape = 'u8[16384]{0}', space=vmem, size = 0x4000, scoped, tag = 'output window, operand 0']
    %8 = vsyncpa [#allocation3], 0
    %s9 = scalar_lea.sflag [#allocation3], 1
    %10 = vsyncpa %s9, 0
    %11 = vsyncpa [#allocation6], 0
    %12 = vsyncpa [#allocation4], 0
    %s13 = scalar_lea.sflag [#allocation4], 1
    %14 = vsyncpa %s13, 0
    loop: start=0, step=1, limit=4
    $region2: #{tpu_custom_call.1} parent=1 // loop_pre_header
      _
    $region3: #{tpu_custom_call.1} parent=1 // loop_header
      %s16 = sphi 0, %s20
      %p17 = scmp.ge.s32.totalorder %s16, 4
      %s26 = sphi 0, %s28
      %s29 = sphi 0, %s26
      %s30 = sphi 0, %s29
      %s46 = sphi 0, %s30
      %s50 = sphi 0, %s50
      %s52 = sphi 0, %s50
      %s53 = sphi 0, %s52
      %s67 = sphi 0, %s53
      %s71 = sphi 0, %s71
      %s73 = sphi 0, %s71
      %s74 = sphi 0, %s73
      %s88 = sphi 0, %s74
      %s94 = sphi 0, %s96
      %s97 = sphi 0, %s94
      %s98 = sphi 0, %s97
      %s114 = sphi 0, %s98
    $region4: #{tpu_custom_call.1} parent=1 // loop_header_branch
      %19 = sbr.rel (%p17) target = $region8
    $region5: #{tpu_custom_call.1} parent=1 // loop_body
      %s21 = ssub.s32 %s16, 1
      %s22 = ssub.s32 %s16, 2
      %s23 = sadd.s32 %s16, 1
      %s24 = ssub.s32 %s16, %s23
      %p25 = scmp.eq.s32.totalorder %s24, 0
      %s27 = sadd.s32 %s26, 1
      %s28 = scalar_select %p25, %s26, %s27
      %p31 = pneg %p25
      %p32 = scmp.eq.s32.totalorder %s16, 1
      %p33 = por %p31, %p32
      %p34 = scmp.ne.s32.totalorder %s26, %s29
      %p35 = scmp.eq.s32.totalorder %s16, 0
      %p36 = por %p34, %p35
      %p37 = scmp.ne.s32.totalorder %s26, %s29
      %p38 = scmp.eq.s32.totalorder %s21, 1
      %p39 = por %p37, %p38
      %p40 = scmp.ne.s32.totalorder %s29, %s30
      %p41 = scmp.eq.s32.totalorder %s21, 0
      %p42 = por %p40, %p41
      %p43 = scmp.ne.s32.totalorder %s29, %s30
      %p44 = scmp.eq.s32.totalorder %s22, 1
      %p45 = por %p43, %p44
      %p47 = scmp.ne.s32.totalorder %s30, %s46
      %p48 = scmp.eq.s32.totalorder %s22, 0
      %p49 = por %p47, %p48
      %s51 = sadd.s32 %s50, 1
      %p54 = scmp.eq.s32.totalorder %s16, 1
      %p55 = scmp.ne.s32.totalorder %s50, %s52
      %p56 = scmp.eq.s32.totalorder %s16, 0
      %p57 = por %p55, %p56
      %p58 = scmp.ne.s32.totalorder %s50, %s52
      %p59 = scmp.eq.s32.totalorder %s21, 1
      %p60 = por %p58, %p59
      %p61 = scmp.ne.s32.totalorder %s52, %s53
      %p62 = scmp.eq.s32.totalorder %s21, 0
      %p63 = por %p61, %p62
      %p64 = scmp.ne.s32.totalorder %s52, %s53
      %p65 = scmp.eq.s32.totalorder %s22, 1
      %p66 = por %p64, %p65
      %p68 = scmp.ne.s32.totalorder %s53, %s67
      %p69 = scmp.eq.s32.totalorder %s22, 0
      %p70 = por %p68, %p69
      %s72 = sadd.s32 %s71, 1
      %p75 = scmp.eq.s32.totalorder %s16, 1
      %p76 = scmp.ne.s32.totalorder %s71, %s73
      %p77 = scmp.eq.s32.totalorder %s16, 0
      %p78 = por %p76, %p77
      %p79 = scmp.ne.s32.totalorder %s71, %s73
      %p80 = scmp.eq.s32.totalorder %s21, 1
      %p81 = por %p79, %p80
      %p82 = scmp.ne.s32.totalorder %s73, %s74
      %p83 = scmp.eq.s32.totalorder %s21, 0
      %p84 = por %p82, %p83
      %p85 = scmp.ne.s32.totalorder %s73, %s74
      %p86 = scmp.eq.s32.totalorder %s22, 1
      %p87 = por %p85, %p86
      %p89 = scmp.ne.s32.totalorder %s74, %s88
      %p90 = scmp.eq.s32.totalorder %s22, 0
      %p91 = por %p89, %p90
      %s92 = ssub.s32 %s16, %s23
      %p93 = scmp.eq.s32.totalorder %s92, 0
      %s95 = sadd.s32 %s94, 1
      %s96 = scalar_select %p93, %s94, %s95
      %p99 = pneg %p93
      %p100 = scmp.eq.s32.totalorder %s16, 1
      %p101 = por %p99, %p100
      %p102 = scmp.ne.s32.totalorder %s94, %s97
      %p103 = scmp.eq.s32.totalorder %s16, 0
      %p104 = por %p102, %p103
      %p105 = scmp.ne.s32.totalorder %s94, %s97
      %p106 = scmp.eq.s32.totalorder %s21, 1
      %p107 = por %p105, %p106
      %p108 = scmp.ne.s32.totalorder %s97, %s98
      %p109 = scmp.eq.s32.totalorder %s21, 0
      %p110 = por %p108, %p109
      %p111 = scmp.ne.s32.totalorder %s97, %s98
      %p112 = scmp.eq.s32.totalorder %s22, 1
      %p113 = por %p111, %p112
      %p115 = scmp.ne.s32.totalorder %s98, %s114
      %p116 = scmp.eq.s32.totalorder %s22, 0
      %p117 = por %p115, %p116
      %p118 = scmp.le.s32.totalorder 1, %s16
      %p119 = scmp.lt.s32.totalorder %s16, 3
      %p120 = pnand %p118, %p119
      %p121 = pneg %p120
      // Predicated region
      $region9: #{tpu_custom_call.1} parent=5 // pred_check
        _
      $region10: #{tpu_custom_call.1} parent=5 // pred_check_branch
        %123 = sbr.rel (%p120) target = $region12
      $region11: #{tpu_custom_call.1} parent=5 // pred_region
        %s124 = ssub.s32 %s16, 1
        // Predicated region
        $region13: #{tpu_custom_call.1} parent=11 // pred_check
          %p125 = pneg %p63
        $region14: #{tpu_custom_call.1} parent=11 // pred_check_branch
          %127 = sbr.rel (%p125) target = $region16
        $region15: #{tpu_custom_call.1} parent=11 // pred_region
          %s129 = ssub.s32 512, 512
          %130 = vsyncadd [#allocation6], %s129
          %s131 = sshll.u32 [#allocation5], 4
          %s132 = int_to_ptr.vmem [resolvable:$true] %s131
          %137 = dma.hbm_to_vmem [thread:$0]  %s1, 512, %s132, [#allocation6], 64, 64, 4
        $region16: #{tpu_custom_call.1} parent=11 // pred_fallthru
          _
        // Predicated region
        $region17: #{tpu_custom_call.1} parent=11 // pred_check
          %p138 = pneg %p84
        $region18: #{tpu_custom_call.1} parent=11 // pred_check_branch
          %140 = sbr.rel (%p138) target = $region20
        $region19: #{tpu_custom_call.1} parent=11 // pred_region
          _
        $region20: #{tpu_custom_call.1} parent=11 // pred_fallthru
          _
      $region12: #{tpu_custom_call.1} parent=5 // pred_fallthru
        _
      %p141 = scmp.lt.s32.totalorder %s16, 2
      // Predicated region
      $region21: #{tpu_custom_call.1} parent=5 // pred_check
        %p142 = pneg %p141
      $region22: #{tpu_custom_call.1} parent=5 // pred_check_branch
        %144 = sbr.rel (%p142) target = $region24
      $region23: #{tpu_custom_call.1} parent=5 // pred_region
        // Predicated region
        $region25: #{tpu_custom_call.1} parent=23 // pred_check
          %p145 = pneg %p36
        $region26: #{tpu_custom_call.1} parent=23 // pred_check_branch
          %147 = sbr.rel (%p145) target = $region28
        $region27: #{tpu_custom_call.1} parent=23 // pred_region
          %s148 = sand.u32 %s26, 1
          %s149 = scalar_lea.sflag [#allocation3], %s148
          %s150 = sand.u32 %s26, 1
          %s151 = smul.addr %s150, 32
          %s152 = scalar_lea.vmem [#allocation2], %s151
          %s153 = smul.u32 4, %s16
          %s155 = ssub.s32 512, 512
          %156 = vsyncadd %s149, %s155
          %s157 = smul.addr %s153, 4
          %s158 = smul.addr %s157, 32
          %s159 = scalar_lea.hbm %s0, %s158
          %s160 = sshll.u32 %s152, 4
          %s161 = int_to_ptr.vmem [resolvable:$true] %s160
          %166 = dma.hbm_to_vmem [thread:$0]  %s159, 512, %s161, %s149, 32, 32, 2
        $region28: #{tpu_custom_call.1} parent=23 // pred_fallthru
          _
      $region24: #{tpu_custom_call.1} parent=5 // pred_fallthru
        _
      %p167 = scmp.le.s32.totalorder 1, %s16
      %p168 = scmp.lt.s32.totalorder %s16, 3
      %p169 = pnand %p167, %p168
      %p170 = pneg %p169
      // Predicated region
      $region29: #{tpu_custom_call.1} parent=5 // pred_check
        _
      $region30: #{tpu_custom_call.1} parent=5 // pred_check_branch
        %172 = sbr.rel (%p169) target = $region32
      $region31: #{tpu_custom_call.1} parent=5 // pred_region
        %s173 = ssub.s32 %s16, 1
        %s174 = sand.u32 %s29, 1
        %s175 = scalar_lea.sflag [#allocation3], %s174
        %s176 = sand.u32 %s29, 1
        %s177 = smul.addr %s176, 32
        %s178 = scalar_lea.vmem [#allocation2], %s177
        // Predicated region
        $region33: #{tpu_custom_call.1} parent=31 // pred_check
          %p179 = pneg %p42
        $region34: #{tpu_custom_call.1} parent=31 // pred_check_branch
          %181 = sbr.rel (%p179) target = $region36
        $region35: #{tpu_custom_call.1} parent=31 // pred_region
          %182 = dma.done %s175, 512
        $region36: #{tpu_custom_call.1} parent=31 // pred_fallthru
          _
        // Predicated region
        $region37: #{tpu_custom_call.1} parent=31 // pred_check
          %p183 = pneg %p63
        $region38: #{tpu_custom_call.1} parent=31 // pred_check_branch
          %185 = sbr.rel (%p183) target = $region40
        $region39: #{tpu_custom_call.1} parent=31 // pred_region
          %186 = dma.done [#allocation6], 512
        $region40: #{tpu_custom_call.1} parent=31 // pred_fallthru
          _
        %s187 = sand.u32 %s29, 1
        %s188 = scalar_lea.sflag [#allocation3], %s187
        %s189 = sand.u32 %s29, 1
        %s190 = smul.addr %s189, 32
        %s191 = scalar_lea.vmem [#allocation2], %s190
        %p192 = pneg %p42
        %p193 = pneg %p39
        %p194 = pneg %p63
        %p195 = pneg %p60
        %p196 = pneg %p84
        %p197 = pneg %p81
        %p198 = pneg %p110
        %p199 = pneg %p107
        %s200 = sand.u32 %s97, 1
        %s201 = scalar_lea.sflag [#allocation4], %s200
        %s202 = sand.u32 %s97, 1
        %s203 = smul.addr %s202, 16
        %s204 = scalar_lea.vmem [#allocation7], %s203
        %s205 = smul.u32 4, %s21
        %s206 = smul.u32 4, %s21
        %v208 = vld [vmem:[%s178] sm:$0x3]
        %v209 = vld [vmem:[%s178 + $0x2] sm:$0x3]
        %v210 = vld [vmem:[%s178 + $0x4] sm:$0x3]
        %v211 = vld [vmem:[%s178 + $0x6] sm:$0x3]
        %v212 = vld [vmem:[%s178 + $0x8] sm:$0x3]
        %v213 = vld [vmem:[%s178 + $0xa] sm:$0x3]
        %v214 = vld [vmem:[%s178 + $0xc] sm:$0x3]
        %v215 = vld [vmem:[%s178 + $0xe] sm:$0x3]
        %v216 = vld [vmem:[%s178 + $0x10] sm:$0x3]
        %v217 = vld [vmem:[%s178 + $0x12] sm:$0x3]
        %v218 = vld [vmem:[%s178 + $0x14] sm:$0x3]
        %v219 = vld [vmem:[%s178 + $0x16] sm:$0x3]
        %v220 = vld [vmem:[%s178 + $0x18] sm:$0x3]
        %v221 = vld [vmem:[%s178 + $0x1a] sm:$0x3]
        %v222 = vld [vmem:[%s178 + $0x1c] sm:$0x3]
        %v223 = vld [vmem:[%s178 + $0x1e] sm:$0x3]
        %v224 = vld [vmem:[#allocation5] sm:$0xf]
        %v225 = vld [vmem:[#allocation5 + $0x4] sm:$0xf]
        %v226 = vld [vmem:[#allocation5 + $0x8] sm:$0xf]
        %v227 = vld [vmem:[#allocation5 + $0xc] sm:$0xf]
        %v228 = vld [vmem:[#allocation5 + $0x10] sm:$0xf]
        %v229 = vld [vmem:[#allocation5 + $0x14] sm:$0xf]
        %v230 = vld [vmem:[#allocation5 + $0x18] sm:$0xf]
        %v231 = vld [vmem:[#allocation5 + $0x1c] sm:$0xf]
        %v236 = vcombine.low %v209, %v213
        %v237 = vcombine.low %v217, %v221
        %v239 = vunpack.c.l.s4 1983009808
        %v240 = vunpack.c.0.s8 %v239
        %v241 = vlaneseq
        %v242 = vshrl.u32 %v241, 7
        %v243 = vsub.s32 %v240, %v242
        %v244 = vrot.slane %v236, %v243
        %v246 = vunpack.c.l.s4 1983009808
        %v247 = vunpack.c.0.s8 %v246
        %v248 = vlaneseq
        %v249 = vshrl.u32 %v248, 7
        %v250 = vsub.s32 %v247, %v249
        %v251 = vrot.slane %v237, %v250
        %v252 = vcombine.low %v244, %v251
        %v255 = vunpack.c.l.b16 %v226
        %v256 = vunpack.c.l.b16 %v227
        %v257 = vpack.c.b16 %v256, %v255
        %vm259 = vcmask 130048
        %v261 = vsel %vm259, %v252, 0
        %263 = vmatprep.subr.bf16.mxu0 0
        %264 = vmatpush1.bf16.msra.mxu0 0
        %265 = vmatprep.subr.bf16.mxu0 0
        %266 = vmatpush1.bf16.msra.mxu0 0
        %267 = vmatprep.subr.bf16.mxu0 0
        %268 = vmatpush1.bf16.msra.mxu0 0
        %269 = vmatprep.subr.bf16.mxu0 0
        %270 = vmatpush1.bf16.msra.mxu0 0
        %271 = vmatprep.subr.bf16.mxu0 0
        %272 = vmatpush1.bf16.msra.mxu0 0
        %273 = vmatprep.subr.bf16.mxu0 0
        %274 = vmatpush1.bf16.msra.mxu0 0
        %275 = vmatprep.subr.bf16.mxu0 0
        %276 = vmatpush1.bf16.msra.mxu0 0
        %277 = vmatprep.subr.bf16.mxu0 0
        %278 = vmatpush1.bf16.msra.mxu0 %v257
        %279 = vmatprep.subr.bf16.mxu0 0
        %280 = vmatpush2.bf16.msra.mxu0 0
        %281 = vmatprep.subr.bf16.mxu0 0
        %282 = vmatpush2.bf16.msra.mxu0 0
        %283 = vmatprep.subr.bf16.mxu0 0
        %284 = vmatpush2.bf16.msra.mxu0 0
        %285 = vmatprep.subr.bf16.mxu0 0
        %286 = vmatpush2.bf16.msra.mxu0 0
        %287 = vmatprep.subr.bf16.mxu0 0
        %288 = vmatpush2.bf16.msra.mxu0 0
        %289 = vmatprep.subr.bf16.mxu0 0
        %290 = vmatpush2.bf16.msra.mxu0 0
        %291 = vmatprep.subr.bf16.mxu0 0
        %292 = vmatpush2.bf16.msra.mxu0 0
        %293 = vmatprep.subr.bf16.mxu0 0
        %294 = vmatpush2.bf16.msra.mxu0 0
        %295 = vmatprep.mubr.bf16.mxu0 0
        %296 = vmatmul.mubr.bf16.gmra.mxu0 %v261
        %v297 = vpop.f32.mrf.mxu0
        %v298 = vadd.f32 0.0, %v297
        %v299 = vpop.f32.mrf.mxu0
        %v300 = vpop.f32.mrf.mxu0
        %v301 = vadd.f32 0.0, %v300
        %v302 = vpop.f32.mrf.mxu0
        %303 = vdwg.mxu0
        %v308 = vcombine.low %v208, %v212
        %v309 = vcombine.low %v216, %v220
        %v311 = vunpack.c.l.s4 1983009808
        %v312 = vunpack.c.0.s8 %v311
        %v313 = vlaneseq
        %v314 = vshrl.u32 %v313, 7
        %v315 = vsub.s32 %v312, %v314
        %v316 = vrot.slane %v308, %v315
        %v318 = vunpack.c.l.s4 1983009808
        %v319 = vunpack.c.0.s8 %v318
        %v320 = vlaneseq
        %v321 = vshrl.u32 %v320, 7
        %v322 = vsub.s32 %v319, %v321
        %v323 = vrot.slane %v309, %v322
        %v324 = vcombine.low %v316, %v323
        %v327 = vunpack.c.l.b16 %v224
        %v328 = vunpack.c.l.b16 %v225
        %v329 = vpack.c.b16 %v328, %v327
        %v332 = vsel %vm259, %v324, 0
        %334 = vmatprep.subr.bf16.mxu0 0
        %335 = vmatpush1.bf16.msra.mxu0 0
        %336 = vmatprep.subr.bf16.mxu0 0
        %337 = vmatpush1.bf16.msra.mxu0 0
        %338 = vmatprep.subr.bf16.mxu0 0
        %339 = vmatpush1.bf16.msra.mxu0 0
        %340 = vmatprep.subr.bf16.mxu0 0
        %341 = vmatpush1.bf16.msra.mxu0 0
        %342 = vmatprep.subr.bf16.mxu0 0
        %343 = vmatpush1.bf16.msra.mxu0 0
        %344 = vmatprep.subr.bf16.mxu0 0
        %345 = vmatpush1.bf16.msra.mxu0 0
        %346 = vmatprep.subr.bf16.mxu0 0
        %347 = vmatpush1.bf16.msra.mxu0 0
        %348 = vmatprep.subr.bf16.mxu0 0
        %349 = vmatpush1.bf16.msra.mxu0 %v329
        %350 = vmatprep.subr.bf16.mxu0 0
        %351 = vmatpush2.bf16.msra.mxu0 0
        %352 = vmatprep.subr.bf16.mxu0 0
        %353 = vmatpush2.bf16.msra.mxu0 0
        %354 = vmatprep.subr.bf16.mxu0 0
        %355 = vmatpush2.bf16.msra.mxu0 0
        %356 = vmatprep.subr.bf16.mxu0 0
        %357 = vmatpush2.bf16.msra.mxu0 0
        %358 = vmatprep.subr.bf16.mxu0 0
        %359 = vmatpush2.bf16.msra.mxu0 0
        %360 = vmatprep.subr.bf16.mxu0 0
        %361 = vmatpush2.bf16.msra.mxu0 0
        %362 = vmatprep.subr.bf16.mxu0 0
        %363 = vmatpush2.bf16.msra.mxu0 0
        %364 = vmatprep.subr.bf16.mxu0 0
        %365 = vmatpush2.bf16.msra.mxu0 0
        %366 = vmatprep.mubr.bf16.mxu0 0
        %367 = vmatmul.mubr.bf16.gmra.mxu0 %v332
        %v368 = vpop.f32.mrf.mxu0
        %v369 = vadd.f32 %v298, %v368
        %v370 = vpop.f32.mrf.mxu0
        %v371 = vpop.f32.mrf.mxu0
        %v372 = vadd.f32 %v301, %v371
        %v373 = vpop.f32.mrf.mxu0
        %374 = vdwg.mxu0
        %v379 = vcombine.low %v210, %v214
        %v380 = vcombine.low %v218, %v222
        %v382 = vunpack.c.l.s4 1983009808
        %v383 = vunpack.c.0.s8 %v382
        %v384 = vlaneseq
        %v385 = vshrl.u32 %v384, 7
        %v386 = vsub.s32 %v383, %v385
        %v387 = vrot.slane %v379, %v386
        %v389 = vunpack.c.l.s4 1983009808
        %v390 = vunpack.c.0.s8 %v389
        %v391 = vlaneseq
        %v392 = vshrl.u32 %v391, 7
        %v393 = vsub.s32 %v390, %v392
        %v394 = vrot.slane %v380, %v393
        %v395 = vcombine.low %v387, %v394
        %v398 = vunpack.c.l.b16 %v228
        %v399 = vunpack.c.l.b16 %v229
        %v400 = vpack.c.b16 %v399, %v398
        %v403 = vsel %vm259, %v395, 0
        %405 = vmatprep.subr.bf16.mxu0 0
        %406 = vmatpush1.bf16.msra.mxu0 0
        %407 = vmatprep.subr.bf16.mxu0 0
        %408 = vmatpush1.bf16.msra.mxu0 0
        %409 = vmatprep.subr.bf16.mxu0 0
        %410 = vmatpush1.bf16.msra.mxu0 0
        %411 = vmatprep.subr.bf16.mxu0 0
        %412 = vmatpush1.bf16.msra.mxu0 0
        %413 = vmatprep.subr.bf16.mxu0 0
        %414 = vmatpush1.bf16.msra.mxu0 0
        %415 = vmatprep.subr.bf16.mxu0 0
        %416 = vmatpush1.bf16.msra.mxu0 0
        %417 = vmatprep.subr.bf16.mxu0 0
        %418 = vmatpush1.bf16.msra.mxu0 0
        %419 = vmatprep.subr.bf16.mxu0 0
        %420 = vmatpush1.bf16.msra.mxu0 %v400
        %421 = vmatprep.subr.bf16.mxu0 0
        %422 = vmatpush2.bf16.msra.mxu0 0
        %423 = vmatprep.subr.bf16.mxu0 0
        %424 = vmatpush2.bf16.msra.mxu0 0
        %425 = vmatprep.subr.bf16.mxu0 0
        %426 = vmatpush2.bf16.msra.mxu0 0
        %427 = vmatprep.subr.bf16.mxu0 0
        %428 = vmatpush2.bf16.msra.mxu0 0
        %429 = vmatprep.subr.bf16.mxu0 0
        %430 = vmatpush2.bf16.msra.mxu0 0
        %431 = vmatprep.subr.bf16.mxu0 0
        %432 = vmatpush2.bf16.msra.mxu0 0
        %433 = vmatprep.subr.bf16.mxu0 0
        %434 = vmatpush2.bf16.msra.mxu0 0
        %435 = vmatprep.subr.bf16.mxu0 0
        %436 = vmatpush2.bf16.msra.mxu0 0
        %437 = vmatprep.mubr.bf16.mxu0 0
        %438 = vmatmul.mubr.bf16.gmra.mxu0 %v403
        %v439 = vpop.f32.mrf.mxu0
        %v440 = vadd.f32 0.0, %v439
        %v441 = vpop.f32.mrf.mxu0
        %v442 = vpop.f32.mrf.mxu0
        %v443 = vadd.f32 0.0, %v442
        %v444 = vpop.f32.mrf.mxu0
        %445 = vdwg.mxu0
        %v446 = vadd.f32 %v369, %v440
        %v447 = vadd.f32 %v372, %v443
        %v452 = vcombine.low %v211, %v215
        %v453 = vcombine.low %v219, %v223
        %v455 = vunpack.c.l.s4 1983009808
        %v456 = vunpack.c.0.s8 %v455
        %v457 = vlaneseq
        %v458 = vshrl.u32 %v457, 7
        %v459 = vsub.s32 %v456, %v458
        %v460 = vrot.slane %v452, %v459
        %v462 = vunpack.c.l.s4 1983009808
        %v463 = vunpack.c.0.s8 %v462
        %v464 = vlaneseq
        %v465 = vshrl.u32 %v464, 7
        %v466 = vsub.s32 %v463, %v465
        %v467 = vrot.slane %v453, %v466
        %v468 = vcombine.low %v460, %v467
        %v471 = vunpack.c.l.b16 %v230
        %v472 = vunpack.c.l.b16 %v231
        %v473 = vpack.c.b16 %v472, %v471
        %v476 = vsel %vm259, %v468, 0
        %478 = vmatprep.subr.bf16.mxu0 0
        %479 = vmatpush1.bf16.msra.mxu0 0
        %480 = vmatprep.subr.bf16.mxu0 0
        %481 = vmatpush1.bf16.msra.mxu0 0
        %482 = vmatprep.subr.bf16.mxu0 0
        %483 = vmatpush1.bf16.msra.mxu0 0
        %484 = vmatprep.subr.bf16.mxu0 0
        %485 = vmatpush1.bf16.msra.mxu0 0
        %486 = vmatprep.subr.bf16.mxu0 0
        %487 = vmatpush1.bf16.msra.mxu0 0
        %488 = vmatprep.subr.bf16.mxu0 0
        %489 = vmatpush1.bf16.msra.mxu0 0
        %490 = vmatprep.subr.bf16.mxu0 0
        %491 = vmatpush1.bf16.msra.mxu0 0
        %492 = vmatprep.subr.bf16.mxu0 0
        %493 = vmatpush1.bf16.msra.mxu0 %v473
        %494 = vmatprep.subr.bf16.mxu0 0
        %495 = vmatpush2.bf16.msra.mxu0 0
        %496 = vmatprep.subr.bf16.mxu0 0
        %497 = vmatpush2.bf16.msra.mxu0 0
        %498 = vmatprep.subr.bf16.mxu0 0
        %499 = vmatpush2.bf16.msra.mxu0 0
        %500 = vmatprep.subr.bf16.mxu0 0
        %501 = vmatpush2.bf16.msra.mxu0 0
        %502 = vmatprep.subr.bf16.mxu0 0
        %503 = vmatpush2.bf16.msra.mxu0 0
        %504 = vmatprep.subr.bf16.mxu0 0
        %505 = vmatpush2.bf16.msra.mxu0 0
        %506 = vmatprep.subr.bf16.mxu0 0
        %507 = vmatpush2.bf16.msra.mxu0 0
        %508 = vmatprep.subr.bf16.mxu0 0
        %509 = vmatpush2.bf16.msra.mxu0 0
        %510 = vmatprep.mubr.bf16.mxu0 0
        %511 = vmatmul.mubr.bf16.gmra.mxu0 %v476
        %v512 = vpop.f32.mrf.mxu0
        %v513 = vadd.f32 0.0, %v512
        %v514 = vpop.f32.mrf.mxu0
        %v515 = vpop.f32.mrf.mxu0
        %v516 = vadd.f32 0.0, %v515
        %v517 = vpop.f32.mrf.mxu0
        %518 = vdwg.mxu0
        %v519 = vadd.f32 %v446, %v513
        %v520 = vadd.f32 %v447, %v516
        %v521 = vld [vmem:[%s2] sm:$0x1]
        %v523 = vlaneseq
        %v524 = vshrl.u32 %v523, 7
        %v525 = vsub.s32 0, %v524
        %v526 = vrot.slane %v521, %v525
        %v528 = vadd.f32 %v519, %v526
        %v529 = vadd.f32 %v520, %v526
        %v532 = vcombine.high %v528, %v528
        %v533 = vcombine.high %v529, %v529
        %536 = vst [vmem:[%s204] sm:$0xf] %v528
        %537 = vst [vmem:[%s204 + $0x4] sm:$0xf] %v532
        %538 = vst [vmem:[%s204 + $0x8] sm:$0xf] %v529
        %539 = vst [vmem:[%s204 + $0xc] sm:$0xf] %v533
        %s540 = sand.u32 %s97, 1
        %s541 = scalar_lea.sflag [#allocation4], %s540
        %s542 = sand.u32 %s97, 1
        %s543 = smul.addr %s542, 16
        %s544 = scalar_lea.vmem [#allocation7], %s543
        // Predicated region
        $region41: #{tpu_custom_call.1} parent=31 // pred_check
          %p545 = pneg %p107
        $region42: #{tpu_custom_call.1} parent=31 // pred_check_branch
          %547 = sbr.rel (%p545) target = $region44
        $region43: #{tpu_custom_call.1} parent=31 // pred_region
          %s548 = smul.u32 4, %s21
          %s550 = ssub.s32 256, 256
          %551 = vsyncadd %s541, %s550
          %s552 = smul.addr %s548, 64
          %s553 = scalar_lea.hbm %s3, %s552
          %s554 = sshll.u32 %s544, 4
          %s555 = int_to_ptr.vmem [resolvable:$true] %s554
          %560 = dma.vmem_to_hbm [thread:$0]  %s555, 256, %s553, %s541, 64, 64, 4
        $region44: #{tpu_custom_call.1} parent=31 // pred_fallthru
          _
      $region32: #{tpu_custom_call.1} parent=5 // pred_fallthru
        _
      %p561 = scmp.le.s32.totalorder 2, %s16
      // Predicated region
      $region45: #{tpu_custom_call.1} parent=5 // pred_check
        %p562 = pneg %p561
      $region46: #{tpu_custom_call.1} parent=5 // pred_check_branch
        %564 = sbr.rel (%p562) target = $region48
      $region47: #{tpu_custom_call.1} parent=5 // pred_region
        %s565 = ssub.s32 %s16, 2
        // Predicated region
        $region49: #{tpu_custom_call.1} parent=47 // pred_check
          %p566 = pneg %p113
        $region50: #{tpu_custom_call.1} parent=47 // pred_check_branch
          %568 = sbr.rel (%p566) target = $region52
        $region51: #{tpu_custom_call.1} parent=47 // pred_region
          %s569 = sand.u32 %s98, 1
          %s570 = scalar_lea.sflag [#allocation4], %s569
          %s571 = sand.u32 %s98, 1
          %s572 = smul.addr %s571, 16
          %s573 = scalar_lea.vmem [#allocation7], %s572
          %574 = dma.done %s570, 256
        $region52: #{tpu_custom_call.1} parent=47 // pred_fallthru
          _
      $region48: #{tpu_custom_call.1} parent=5 // pred_fallthru
        _
    $region6: #{tpu_custom_call.1} parent=1 // loop_footer
      %s20 = sadd.s32 1, %s16
    $region7: #{tpu_custom_call.1} parent=1 // loop_footer_branch
      %15 = sbr.rel target = $region3
    $region8: #{tpu_custom_call.1} parent=1 // loop_exit
      _
    %575 = vsyncpa [#allocation3], 1
    %s576 = scalar_lea.sflag [#allocation3], 1
    %577 = vsyncpa %s576, 1
    %578 = vsyncpa [#allocation6], 1
    %579 = vsyncpa [#allocation4], 1
    %s580 = scalar_lea.sflag [#allocation4], 1
    %581 = vsyncpa %s580, 1

</llo_original>
